<compile_context>
chip_gen: v7x
topology: tpu7x:2x2x1
jax: 0.10.0
libtpu: 0.0.40
codegen_flags: <defaults>
</compile_context>

<pallas_src>
import jax
import jax.numpy as jnp
from jax import lax
from jax.experimental import pallas as pl
from jax.experimental.pallas import tpu as pltpu


def _pick_block_n(n, per_batch_bytes, budget_bytes):
    """Largest divisor of n whose double-buffered blocks fit the VMEM budget."""
    best = 1
    for bn in range(1, n + 1):
        if n % bn == 0 and 2 * bn * per_batch_bytes <= budget_bytes:
            best = bn
    return best


def pyramid_pooling(x, w1, w2, *, vmem_block_budget_bytes=24 * 1024 * 1024):
    N, C, H, W = x.shape
    C2 = w1.shape[0]
    assert H % 2 == 0 and W % 2 == 0, "even H, W assumed (see note at top)"
    assert w1.shape == (C2, C) and w2.shape == (C2, C)

    HW = H * W
    H2, W2 = H // 2, W // 2
    HWh = H2 * W  # number of flattened pixels in the top half (rows 0..H/2-1)
    C_out = C + 2 * C2

    itemsize = jnp.dtype(x.dtype).itemsize
    per_batch_bytes = (C + C_out) * HW * itemsize
    bn = _pick_block_n(N, per_batch_bytes, vmem_block_budget_bytes)

    # Lane-dense views (free reshapes for contiguous NCHW).
    x_flat = x.reshape(N, C, HW)
    w_cat = jnp.concatenate([w1, w2], axis=0)  # (2*C2, C) fused 1x1-conv weights

    inv_hw = 1.0 / float(HW)
    inv_q = 1.0 / float(H2 * W2)

    def kernel(x_ref, w_ref, o_ref):
        # x_ref : (bn, C, HW)   w_ref : (2*C2, C)   o_ref : (bn, C+2*C2, HW)
        dt = o_ref.dtype

        # Spatial masks over the flattened (lane) axis, shared across batch.
        idx = lax.broadcasted_iota(jnp.int32, (1, HW), 1)
        m_top = idx < HWh                 # rows 0..H/2-1
        m_left = (idx % W) < W2           # cols 0..W/2-1 (periodic with period W)
        m_left_h = m_left[:, :HWh]        # same pattern restricted to a half

        # ---- pooled statistics for all bn batch elements -> one matmul ----
        p_cols = []
        for b in range(bn):
            xb = x_ref[b].astype(jnp.float32)          # (C, HW)
            top = xb[:, :HWh]                          # (C, HW/2)
            bot = xb[:, HWh:]                          # (C, HW/2)
            s_top = jnp.sum(top, axis=1, keepdims=True)          # (C, 1)
            s_bot = jnp.sum(bot, axis=1, keepdims=True)
            s_tl = jnp.sum(jnp.where(m_left_h, top, 0.0), axis=1, keepdims=True)
            s_bl = jnp.sum(jnp.where(m_left_h, bot, 0.0), axis=1, keepdims=True)
            s_tr = s_top - s_tl
            s_br = s_bot - s_bl
            g = (s_top + s_bot) * inv_hw                          # global mean
            quads = jnp.concatenate([s_tl, s_tr, s_bl, s_br], axis=1) * inv_q
            p_cols.append(jnp.concatenate([g, quads], axis=1))    # (C, 5)
        p_all = jnp.concatenate(p_cols, axis=1)                   # (C, 5*bn)

        # ---- fused 1x1 conv (no bias) + ReLU on pooled features ----
        feats = jnp.maximum(
            jnp.dot(w_ref[...].astype(jnp.float32), p_all,
                    preferred_element_type=jnp.float32),
            0.0)                                                  # (2*C2, 5*bn)

        # ---- write output: [x | upsample(feat1) | upsample(feat2)] ----
        for b in range(bn):
            base = 5 * b
            # passthrough copy of x
            o_ref[b, :C, :] = x_ref[b]

            # feat1: global-pooled branch, constant over all H*W pixels.
            f1 = feats[:C2, base:base + 1].astype(dt)             # (C2, 1)
            o_ref[b, C:C + C2, :] = jnp.broadcast_to(f1, (C2, HW))

            # feat2: quadrant-pooled branch; one full-width masked-select store.
            v_tl = feats[C2:, base + 1:base + 2].astype(dt)       # (C2, 1)
            v_tr = feats[C2:, base + 2:base + 3].astype(dt)
            v_bl = feats[C2:, base + 3:base + 4].astype(dt)
            v_br = feats[C2:, base + 4:base + 5].astype(dt)
            feat2 = jnp.where(m_top,
                              jnp.where(m_left, v_tl, v_tr),
                              jnp.where(m_left, v_bl, v_br))      # (C2, HW)
            o_ref[b, C + C2:, :] = feat2

    cost = pl.CostEstimate(
        flops=2 * N * (2 * C2) * C * 5 + 4 * N * C * HW,
        transcendentals=0,
        bytes_accessed=N * (C + C_out) * HW * itemsize + 2 * C2 * C * itemsize,
    )

    out_flat = pl.pallas_call(
        kernel,
        out_shape=jax.ShapeDtypeStruct((N, C_out, HW), x.dtype),
        grid=(N // bn,),
        in_specs=[
            pl.BlockSpec((bn, C, HW), lambda n: (n, 0, 0)),
            pl.BlockSpec((2 * C2, C), lambda n: (0, 0)),
        ],
        out_specs=pl.BlockSpec((bn, C_out, HW), lambda n: (n, 0, 0)),
        compiler_params=pltpu.CompilerParams(
            dimension_semantics=("parallel",),
            vmem_limit_bytes=32 * 1024 * 1024,
        ),
        cost_estimate=cost,
    )(x_flat, w_cat)

    return out_flat.reshape(N, C_out, H, W)


def pyramid_pooling_ref(x, w1, w2):
    """Pure-JAX reference mirroring the PyTorch forward."""
    N, C, H, W = x.shape
    C2 = w1.shape[0]
    g = x.mean(axis=(2, 3))                                        # (N, C)
    f1 = jnp.maximum(jnp.einsum('oc,nc->no', w1, g), 0.0)
    feat1 = jnp.broadcast_to(f1[:, :, None, None], (N, C2, H, W))
    xq = x.reshape(N, C, 2, H // 2, 2, W // 2).mean(axis=(3, 5))   # (N, C, 2, 2)
    f2 = jnp.maximum(jnp.einsum('oc,ncij->noij', w2, xq), 0.0)
    feat2 = jnp.repeat(jnp.repeat(f2, H // 2, axis=2), W // 2, axis=3)
    return jnp.concatenate([x, feat1, feat2], axis=1)


if __name__ == "__main__":
    # Small shapes consistent with the module: in_channels=4 -> out_channels=2.
    N, C, H, W = 2, 4, 16, 16
    C2 = C // 2

    key = jax.random.PRNGKey(0)
    kx, k1, k2 = jax.random.split(key, 3)
    x = jax.random.normal(kx, (N, C, H, W), dtype=jnp.float32)
    # 1x1 Conv2d(C -> C2, bias=False) == (C2, C) matrix.
    w1 = 0.1 * jax.random.normal(k1, (C2, C), dtype=jnp.float32)
    w2 = 0.1 * jax.random.normal(k2, (C2, C), dtype=jnp.float32)

    out = pyramid_pooling(x, w1, w2)
    out = jax.block_until_ready(out)

    ref = pyramid_pooling_ref(x, w1, w2)
    assert out.shape == (N, C + 2 * C2, H, W), out.shape
    assert jnp.allclose(out, ref, atol=1e-5, rtol=1e-5), "mismatch vs reference"

    print("KERNEL_OK")
</pallas_src>

<mosaic_0001>
module attributes {stable_mosaic.version = 11 : i64} {
  func.func @kernel(%arg0: i32, %arg1: memref<2x4x256xf32, #tpu.memory_space<vmem>>, %arg2: memref<4x4xf32, #tpu.memory_space<vmem>>, %arg3: memref<2x8x256xf32, #tpu.memory_space<vmem>>) attributes {dimension_semantics = [#tpu.dimension_semantics<parallel>], iteration_bounds = array<i64: 1>, scalar_prefetch = 0 : i64, scratch_operands = 0 : i64, tpu.core_type = #tpu.core_type<tc>, window_params = [{transform_indices = @transform_0, window_bounds = array<i64: 2, 4, 256>}, {pipeline_mode = #tpu.pipeline_mode<synchronous>, transform_indices = @transform_1, window_bounds = array<i64: 4, 4>}, {transform_indices = @transform_2, window_bounds = array<i64: 2, 8, 256>}]} {
    %0 = tpu.iota {dimensions = array<i32: 1>} : vector<1x256xi32>
    %c128_i32 = arith.constant 128 : i32
    %1 = vector.broadcast %c128_i32 : i32 to vector<1x256xi32>
    %2 = arith.cmpi slt, %0, %1 : vector<1x256xi32>
    %c16_i32 = arith.constant 16 : i32
    %c0_i32 = arith.constant 0 : i32
    %3 = arith.cmpi eq, %c16_i32, %c0_i32 : i32
    %c1_i32 = arith.constant 1 : i32
    %4 = arith.select %3, %c1_i32, %c16_i32 : i32
    %5 = vector.broadcast %4 : i32 to vector<1x256xi32>
    %6 = arith.remsi %0, %5 : vector<1x256xi32>
    %c0_i32_0 = arith.constant 0 : i32
    %7 = vector.broadcast %c0_i32_0 : i32 to vector<1x256xi32>
    %8 = arith.cmpi ne, %6, %7 : vector<1x256xi32>
    %c0_i32_1 = arith.constant 0 : i32
    %9 = vector.broadcast %c0_i32_1 : i32 to vector<1x256xi32>
    %10 = arith.cmpi slt, %6, %9 : vector<1x256xi32>
    %c0_i32_2 = arith.constant 0 : i32
    %11 = arith.cmpi slt, %4, %c0_i32_2 : i32
    %12 = vector.broadcast %11 : i1 to vector<1x256xi1>
    %13 = vector.broadcast %12 : vector<1x256xi1> to vector<1x256xi1>
    %14 = arith.xori %10, %13 : vector<1x256xi1>
    %15 = arith.andi %14, %8 : vector<1x256xi1>
    %16 = vector.broadcast %4 : i32 to vector<1x256xi32>
    %17 = arith.addi %6, %16 : vector<1x256xi32>
    %18 = arith.select %15, %17, %6 : vector<1x256xi1>, vector<1x256xi32>
    %c8_i32 = arith.constant 8 : i32
    %19 = vector.broadcast %c8_i32 : i32 to vector<1x256xi32>
    %20 = arith.cmpi slt, %18, %19 : vector<1x256xi32>
    %21 = vector.extract_strided_slice %20 {offsets = [0, 0], sizes = [1, 128], strides = [1, 1]} : vector<1x256xi1> to vector<1x128xi1>
    %c0 = arith.constant 0 : index
    %c0_3 = arith.constant 0 : index
    %c0_4 = arith.constant 0 : index
    %22 = vector.load %arg1[%c0, %c0_3, %c0_4] : memref<2x4x256xf32, #tpu.memory_space<vmem>>, vector<1x4x256xf32>
    %23 = vector.shape_cast %22 : vector<1x4x256xf32> to vector<4x256xf32>
    %24 = vector.extract_strided_slice %23 {offsets = [0, 0], sizes = [4, 128], strides = [1, 1]} : vector<4x256xf32> to vector<4x128xf32>
    %25 = vector.extract_strided_slice %23 {offsets = [0, 128], sizes = [4, 128], strides = [1, 1]} : vector<4x256xf32> to vector<4x128xf32>
    %cst = arith.constant dense<0.000000e+00> : vector<4xf32>
    %26 = vector.multi_reduction <add>, %24, %cst [1] : vector<4x128xf32> to vector<4xf32>
    %27 = vector.shape_cast %26 : vector<4xf32> to vector<4x1xf32>
    %cst_5 = arith.constant dense<0.000000e+00> : vector<4xf32>
    %28 = vector.multi_reduction <add>, %25, %cst_5 [1] : vector<4x128xf32> to vector<4xf32>
    %29 = vector.shape_cast %28 : vector<4xf32> to vector<4x1xf32>
    %cst_6 = arith.constant 0.000000e+00 : f32
    %30 = vector.shape_cast %21 : vector<1x128xi1> to vector<1x128xi1>
    %31 = vector.broadcast %30 : vector<1x128xi1> to vector<4x128xi1>
    %32 = vector.broadcast %cst_6 : f32 to vector<4x128xf32>
    %33 = arith.select %31, %24, %32 : vector<4x128xi1>, vector<4x128xf32>
    %cst_7 = arith.constant dense<0.000000e+00> : vector<4xf32>
    %34 = vector.multi_reduction <add>, %33, %cst_7 [1] : vector<4x128xf32> to vector<4xf32>
    %35 = vector.shape_cast %34 : vector<4xf32> to vector<4x1xf32>
    %cst_8 = arith.constant 0.000000e+00 : f32
    %36 = vector.shape_cast %21 : vector<1x128xi1> to vector<1x128xi1>
    %37 = vector.broadcast %36 : vector<1x128xi1> to vector<4x128xi1>
    %38 = vector.broadcast %cst_8 : f32 to vector<4x128xf32>
    %39 = arith.select %37, %25, %38 : vector<4x128xi1>, vector<4x128xf32>
    %cst_9 = arith.constant dense<0.000000e+00> : vector<4xf32>
    %40 = vector.multi_reduction <add>, %39, %cst_9 [1] : vector<4x128xf32> to vector<4xf32>
    %41 = vector.shape_cast %40 : vector<4xf32> to vector<4x1xf32>
    %42 = arith.subf %27, %35 : vector<4x1xf32>
    %43 = arith.subf %29, %41 : vector<4x1xf32>
    %44 = arith.addf %27, %29 : vector<4x1xf32>
    %cst_10 = arith.constant 3.906250e-03 : f32
    %45 = vector.broadcast %cst_10 : f32 to vector<4x1xf32>
    %46 = arith.mulf %44, %45 : vector<4x1xf32>
    %47 = tpu.concatenate %35, %42, %41, %43 in 1 : vector<4x1xf32>, vector<4x1xf32>, vector<4x1xf32>, vector<4x1xf32> -> vector<4x4xf32>
    %cst_11 = arith.constant 1.562500e-02 : f32
    %48 = vector.broadcast %cst_11 : f32 to vector<4x4xf32>
    %49 = arith.mulf %47, %48 : vector<4x4xf32>
    %50 = tpu.concatenate %46, %49 in 1 : vector<4x1xf32>, vector<4x4xf32> -> vector<4x5xf32>
    %c1 = arith.constant 1 : index
    %c0_12 = arith.constant 0 : index
    %c0_13 = arith.constant 0 : index
    %51 = vector.load %arg1[%c1, %c0_12, %c0_13] : memref<2x4x256xf32, #tpu.memory_space<vmem>>, vector<1x4x256xf32>
    %52 = vector.shape_cast %51 : vector<1x4x256xf32> to vector<4x256xf32>
    %53 = vector.extract_strided_slice %52 {offsets = [0, 0], sizes = [4, 128], strides = [1, 1]} : vector<4x256xf32> to vector<4x128xf32>
    %54 = vector.extract_strided_slice %52 {offsets = [0, 128], sizes = [4, 128], strides = [1, 1]} : vector<4x256xf32> to vector<4x128xf32>
    %cst_14 = arith.constant dense<0.000000e+00> : vector<4xf32>
    %55 = vector.multi_reduction <add>, %53, %cst_14 [1] : vector<4x128xf32> to vector<4xf32>
    %56 = vector.shape_cast %55 : vector<4xf32> to vector<4x1xf32>
    %cst_15 = arith.constant dense<0.000000e+00> : vector<4xf32>
    %57 = vector.multi_reduction <add>, %54, %cst_15 [1] : vector<4x128xf32> to vector<4xf32>
    %58 = vector.shape_cast %57 : vector<4xf32> to vector<4x1xf32>
    %cst_16 = arith.constant 0.000000e+00 : f32
    %59 = vector.shape_cast %21 : vector<1x128xi1> to vector<1x128xi1>
    %60 = vector.broadcast %59 : vector<1x128xi1> to vector<4x128xi1>
    %61 = vector.broadcast %cst_16 : f32 to vector<4x128xf32>
    %62 = arith.select %60, %53, %61 : vector<4x128xi1>, vector<4x128xf32>
    %cst_17 = arith.constant dense<0.000000e+00> : vector<4xf32>
    %63 = vector.multi_reduction <add>, %62, %cst_17 [1] : vector<4x128xf32> to vector<4xf32>
    %64 = vector.shape_cast %63 : vector<4xf32> to vector<4x1xf32>
    %cst_18 = arith.constant 0.000000e+00 : f32
    %65 = vector.shape_cast %21 : vector<1x128xi1> to vector<1x128xi1>
    %66 = vector.broadcast %65 : vector<1x128xi1> to vector<4x128xi1>
    %67 = vector.broadcast %cst_18 : f32 to vector<4x128xf32>
    %68 = arith.select %66, %54, %67 : vector<4x128xi1>, vector<4x128xf32>
    %cst_19 = arith.constant dense<0.000000e+00> : vector<4xf32>
    %69 = vector.multi_reduction <add>, %68, %cst_19 [1] : vector<4x128xf32> to vector<4xf32>
    %70 = vector.shape_cast %69 : vector<4xf32> to vector<4x1xf32>
    %71 = arith.subf %56, %64 : vector<4x1xf32>
    %72 = arith.subf %58, %70 : vector<4x1xf32>
    %73 = arith.addf %56, %58 : vector<4x1xf32>
    %cst_20 = arith.constant 3.906250e-03 : f32
    %74 = vector.broadcast %cst_20 : f32 to vector<4x1xf32>
    %75 = arith.mulf %73, %74 : vector<4x1xf32>
    %76 = tpu.concatenate %64, %71, %70, %72 in 1 : vector<4x1xf32>, vector<4x1xf32>, vector<4x1xf32>, vector<4x1xf32> -> vector<4x4xf32>
    %cst_21 = arith.constant 1.562500e-02 : f32
    %77 = vector.broadcast %cst_21 : f32 to vector<4x4xf32>
    %78 = arith.mulf %76, %77 : vector<4x4xf32>
    %79 = tpu.concatenate %75, %78 in 1 : vector<4x1xf32>, vector<4x4xf32> -> vector<4x5xf32>
    %80 = tpu.concatenate %50, %79 in 1 : vector<4x5xf32>, vector<4x5xf32> -> vector<4x10xf32>
    %c0_22 = arith.constant 0 : index
    %c0_23 = arith.constant 0 : index
    %81 = vector.load %arg2[%c0_22, %c0_23] : memref<4x4xf32, #tpu.memory_space<vmem>>, vector<4x4xf32>
    %cst_24 = arith.constant dense<0.000000e+00> : vector<4x10xf32>
    %82 = tpu.matmul %81, %80, %cst_24 {dimension_numbers = #tpu.dot_dimension_numbers<[1], [0], [0], [1], [0, 0, 1, 1], [], []>} : vector<4x4xf32>, vector<4x10xf32>, vector<4x10xf32> -> vector<4x10xf32>
    %cst_25 = arith.constant 0.000000e+00 : f32
    %83 = vector.broadcast %cst_25 : f32 to vector<4x10xf32>
    %84 = arith.maximumf %82, %83 : vector<4x10xf32>
    %c0_26 = arith.constant 0 : index
    %c0_27 = arith.constant 0 : index
    %c0_28 = arith.constant 0 : index
    %85 = vector.load %arg1[%c0_26, %c0_27, %c0_28] : memref<2x4x256xf32, #tpu.memory_space<vmem>>, vector<1x4x256xf32>
    %86 = vector.shape_cast %85 : vector<1x4x256xf32> to vector<4x256xf32>
    %c0_29 = arith.constant 0 : index
    %c0_30 = arith.constant 0 : index
    %c0_31 = arith.constant 0 : index
    %87 = vector.load %arg3[%c0_29, %c0_30, %c0_31] : memref<2x8x256xf32, #tpu.memory_space<vmem>>, vector<1x4x256xf32>
    %88 = vector.shape_cast %87 : vector<1x4x256xf32> to vector<4x256xf32>
    %89 = vector.shape_cast %86 : vector<4x256xf32> to vector<1x4x256xf32>
    tpu.vector_store %arg3[%c0_29, %c0_30, %c0_31], %89 {strides = array<i32>} : memref<2x8x256xf32, #tpu.memory_space<vmem>>, vector<1x4x256xf32>,
    %90 = vector.extract_strided_slice %84 {offsets = [0, 0], sizes = [2, 1], strides = [1, 1]} : vector<4x10xf32> to vector<2x1xf32>
    %91 = vector.shape_cast %90 : vector<2x1xf32> to vector<2x1xf32>
    %92 = vector.broadcast %91 : vector<2x1xf32> to vector<2x256xf32>
    %c0_32 = arith.constant 0 : index
    %c4 = arith.constant 4 : index
    %c0_33 = arith.constant 0 : index
    %93 = vector.load %arg3[%c0_32, %c4, %c0_33] : memref<2x8x256xf32, #tpu.memory_space<vmem>>, vector<1x2x256xf32>
    %94 = vector.shape_cast %93 : vector<1x2x256xf32> to vector<2x256xf32>
    %95 = vector.shape_cast %92 : vector<2x256xf32> to vector<1x2x256xf32>
    tpu.vector_store %arg3[%c0_32, %c4, %c0_33], %95 {strides = array<i32>} : memref<2x8x256xf32, #tpu.memory_space<vmem>>, vector<1x2x256xf32>,
    %96 = vector.extract_strided_slice %84 {offsets = [2, 1], sizes = [2, 1], strides = [1, 1]} : vector<4x10xf32> to vector<2x1xf32>
    %97 = vector.extract_strided_slice %84 {offsets = [2, 2], sizes = [2, 1], strides = [1, 1]} : vector<4x10xf32> to vector<2x1xf32>
    %98 = vector.extract_strided_slice %84 {offsets = [2, 3], sizes = [2, 1], strides = [1, 1]} : vector<4x10xf32> to vector<2x1xf32>
    %99 = vector.extract_strided_slice %84 {offsets = [2, 4], sizes = [2, 1], strides = [1, 1]} : vector<4x10xf32> to vector<2x1xf32>
    %100 = vector.shape_cast %20 : vector<1x256xi1> to vector<1x256xi1>
    %101 = vector.broadcast %100 : vector<1x256xi1> to vector<2x256xi1>
    %102 = vector.shape_cast %96 : vector<2x1xf32> to vector<2x1xf32>
    %103 = vector.broadcast %102 : vector<2x1xf32> to vector<2x256xf32>
    %104 = vector.shape_cast %97 : vector<2x1xf32> to vector<2x1xf32>
    %105 = vector.broadcast %104 : vector<2x1xf32> to vector<2x256xf32>
    %106 = arith.select %101, %103, %105 : vector<2x256xi1>, vector<2x256xf32>
    %107 = vector.shape_cast %20 : vector<1x256xi1> to vector<1x256xi1>
    %108 = vector.broadcast %107 : vector<1x256xi1> to vector<2x256xi1>
    %109 = vector.shape_cast %98 : vector<2x1xf32> to vector<2x1xf32>
    %110 = vector.broadcast %109 : vector<2x1xf32> to vector<2x256xf32>
    %111 = vector.shape_cast %99 : vector<2x1xf32> to vector<2x1xf32>
    %112 = vector.broadcast %111 : vector<2x1xf32> to vector<2x256xf32>
    %113 = arith.select %108, %110, %112 : vector<2x256xi1>, vector<2x256xf32>
    %114 = vector.shape_cast %2 : vector<1x256xi1> to vector<1x256xi1>
    %115 = vector.broadcast %114 : vector<1x256xi1> to vector<2x256xi1>
    %116 = arith.select %115, %106, %113 : vector<2x256xi1>, vector<2x256xf32>
    %c0_34 = arith.constant 0 : index
    %c6 = arith.constant 6 : index
    %c0_35 = arith.constant 0 : index
    %117 = vector.load %arg3[%c0_34, %c6, %c0_35] : memref<2x8x256xf32, #tpu.memory_space<vmem>>, vector<1x2x256xf32>
    %118 = vector.shape_cast %117 : vector<1x2x256xf32> to vector<2x256xf32>
    %119 = vector.shape_cast %116 : vector<2x256xf32> to vector<1x2x256xf32>
    tpu.vector_store %arg3[%c0_34, %c6, %c0_35], %119 {strides = array<i32>} : memref<2x8x256xf32, #tpu.memory_space<vmem>>, vector<1x2x256xf32>,
    %c1_36 = arith.constant 1 : index
    %c0_37 = arith.constant 0 : index
    %c0_38 = arith.constant 0 : index
    %120 = vector.load %arg1[%c1_36, %c0_37, %c0_38] : memref<2x4x256xf32, #tpu.memory_space<vmem>>, vector<1x4x256xf32>
    %121 = vector.shape_cast %120 : vector<1x4x256xf32> to vector<4x256xf32>
    %c1_39 = arith.constant 1 : index
    %c0_40 = arith.constant 0 : index
    %c0_41 = arith.constant 0 : index
    %122 = vector.load %arg3[%c1_39, %c0_40, %c0_41] : memref<2x8x256xf32, #tpu.memory_space<vmem>>, vector<1x4x256xf32>
    %123 = vector.shape_cast %122 : vector<1x4x256xf32> to vector<4x256xf32>
    %124 = vector.shape_cast %121 : vector<4x256xf32> to vector<1x4x256xf32>
    tpu.vector_store %arg3[%c1_39, %c0_40, %c0_41], %124 {strides = array<i32>} : memref<2x8x256xf32, #tpu.memory_space<vmem>>, vector<1x4x256xf32>,
    %125 = vector.extract_strided_slice %84 {offsets = [0, 5], sizes = [2, 1], strides = [1, 1]} : vector<4x10xf32> to vector<2x1xf32>
    %126 = vector.shape_cast %125 : vector<2x1xf32> to vector<2x1xf32>
    %127 = vector.broadcast %126 : vector<2x1xf32> to vector<2x256xf32>
    %c1_42 = arith.constant 1 : index
    %c4_43 = arith.constant 4 : index
    %c0_44 = arith.constant 0 : index
    %128 = vector.load %arg3[%c1_42, %c4_43, %c0_44] : memref<2x8x256xf32, #tpu.memory_space<vmem>>, vector<1x2x256xf32>
    %129 = vector.shape_cast %128 : vector<1x2x256xf32> to vector<2x256xf32>
    %130 = vector.shape_cast %127 : vector<2x256xf32> to vector<1x2x256xf32>
    tpu.vector_store %arg3[%c1_42, %c4_43, %c0_44], %130 {strides = array<i32>} : memref<2x8x256xf32, #tpu.memory_space<vmem>>, vector<1x2x256xf32>,
    %131 = vector.extract_strided_slice %84 {offsets = [2, 6], sizes = [2, 1], strides = [1, 1]} : vector<4x10xf32> to vector<2x1xf32>
    %132 = vector.extract_strided_slice %84 {offsets = [2, 7], sizes = [2, 1], strides = [1, 1]} : vector<4x10xf32> to vector<2x1xf32>
    %133 = vector.extract_strided_slice %84 {offsets = [2, 8], sizes = [2, 1], strides = [1, 1]} : vector<4x10xf32> to vector<2x1xf32>
    %134 = vector.extract_strided_slice %84 {offsets = [2, 9], sizes = [2, 1], strides = [1, 1]} : vector<4x10xf32> to vector<2x1xf32>
    %135 = vector.shape_cast %20 : vector<1x256xi1> to vector<1x256xi1>
    %136 = vector.broadcast %135 : vector<1x256xi1> to vector<2x256xi1>
    %137 = vector.shape_cast %131 : vector<2x1xf32> to vector<2x1xf32>
    %138 = vector.broadcast %137 : vector<2x1xf32> to vector<2x256xf32>
    %139 = vector.shape_cast %132 : vector<2x1xf32> to vector<2x1xf32>
    %140 = vector.broadcast %139 : vector<2x1xf32> to vector<2x256xf32>
    %141 = arith.select %136, %138, %140 : vector<2x256xi1>, vector<2x256xf32>
    %142 = vector.shape_cast %20 : vector<1x256xi1> to vector<1x256xi1>
    %143 = vector.broadcast %142 : vector<1x256xi1> to vector<2x256xi1>
    %144 = vector.shape_cast %133 : vector<2x1xf32> to vector<2x1xf32>
    %145 = vector.broadcast %144 : vector<2x1xf32> to vector<2x256xf32>
    %146 = vector.shape_cast %134 : vector<2x1xf32> to vector<2x1xf32>
    %147 = vector.broadcast %146 : vector<2x1xf32> to vector<2x256xf32>
    %148 = arith.select %143, %145, %147 : vector<2x256xi1>, vector<2x256xf32>
    %149 = vector.shape_cast %2 : vector<1x256xi1> to vector<1x256xi1>
    %150 = vector.broadcast %149 : vector<1x256xi1> to vector<2x256xi1>
    %151 = arith.select %150, %141, %148 : vector<2x256xi1>, vector<2x256xf32>
    %c1_45 = arith.constant 1 : index
    %c6_46 = arith.constant 6 : index
    %c0_47 = arith.constant 0 : index
    %152 = vector.load %arg3[%c1_45, %c6_46, %c0_47] : memref<2x8x256xf32, #tpu.memory_space<vmem>>, vector<1x2x256xf32>
    %153 = vector.shape_cast %152 : vector<1x2x256xf32> to vector<2x256xf32>
    %154 = vector.shape_cast %151 : vector<2x256xf32> to vector<1x2x256xf32>
    tpu.vector_store %arg3[%c1_45, %c6_46, %c0_47], %154 {strides = array<i32>} : memref<2x8x256xf32, #tpu.memory_space<vmem>>, vector<1x2x256xf32>,
    return
  }
  func.func @transform_0(%arg0: i32) -> (i32, i32, i32) {
    %c0_i32 = arith.constant 0 : i32
    %c0_i32_0 = arith.constant 0 : i32
    %c0_i32_1 = arith.constant 0 : i32
    return %arg0, %c0_i32, %c0_i32_0 : i32, i32, i32
  }
  func.func @transform_1(%arg0: i32) -> (i32, i32) {
    %c0_i32 = arith.constant 0 : i32
    %c0_i32_0 = arith.constant 0 : i32
    %c0_i32_1 = arith.constant 0 : i32
    return %c0_i32, %c0_i32_0 : i32, i32
  }
  func.func @transform_2(%arg0: i32) -> (i32, i32, i32) {
    %c0_i32 = arith.constant 0 : i32
    %c0_i32_0 = arith.constant 0 : i32
    %c0_i32_1 = arith.constant 0 : i32
    return %arg0, %c0_i32, %c0_i32_0 : i32, i32, i32
  }
}

</mosaic_0001>

<llo_original>
// kernel: tpu_custom_call.1
$region0: #{tpu_custom_call.1}
  #allocation0 [shape = 'u32[]', space=smem, size = 0x4, offset = 0x4, fixed_abs, tag = 'smem constant byte address 0x4 - core index']
  #allocation1 [shape = 'u32[144,128]{1,0:T(1,128)}', space=vmem, size = 0x12000, scoped, tag = 'internal scratch']
  %s0 = inlined_call_operand.hbm [shape: f32[2,4,256], index: 0, kind: input, shape index: {}]
  %s1 = inlined_call_operand.hbm [shape: f32[4,4], index: 1, kind: input, shape index: {}]
  %s2 = inlined_call_operand.hbm [shape: f32[2,8,256], index: 2, kind: output, shape index: {}]
  %s3 = sld [smem:[#allocation0]]
  $region26: #{tpu_custom_call.1} parent=0
    _
  %s5 = ssub.s32 1, %s3
  %s6 = scalar_select 0, %s5, %s3
  $region1: #{tpu_custom_call.1} parent=0
    #allocation2 [shape = 'u8[8192]{0}', space=vmem, size = 0x2000, scoped, tag = 'input window, operand 0, single buffered']
    #allocation3 [shape = 's32[1]{0}', space=sflag, size = 0x4, scoped, tag = 'scoped memory for tpu_custom_call.1']
    #allocation4 [shape = 's32[1]{0}', space=sflag, size = 0x4, scoped, tag = 'scoped memory for tpu_custom_call.1']
    #allocation5 [shape = 'u8[2048]{0}', space=vmem, size = 0x800, scoped, tag = 'input window, operand 1, single buffered']
    #allocation6 [shape = 's32[1]{0}', space=sflag, size = 0x4, scoped, tag = 'scoped memory for tpu_custom_call.1']
    #allocation7 [shape = 'u8[16384]{0}', space=vmem, size = 0x4000, scoped, tag = 'output window, operand 0, single buffered']
    %7 = vsyncpa [#allocation3], 0
    %8 = vsyncpa [#allocation6], 0
    %9 = vsyncpa [#allocation4], 0
    // Predicated region
    $region2: #{tpu_custom_call.1} parent=1 // pred_check
      _
    $region3: #{tpu_custom_call.1} parent=1 // pred_check_branch
      %11 = sbr.rel (0) target = $region5
    $region4: #{tpu_custom_call.1} parent=1 // pred_region
      %s13 = ssub.s32 256, 256
      %14 = vsyncadd [#allocation3], %s13
      %s15 = sshll.u32 [#allocation2], 4
      %s16 = int_to_ptr.vmem [resolvable:$true] %s15
      %21 = dma.hbm_to_vmem [thread:$0]  %s0, 256, %s16, [#allocation3], 128, 128, 8
    $region5: #{tpu_custom_call.1} parent=1 // pred_fallthru
      _
    // Predicated region
    $region6: #{tpu_custom_call.1} parent=1 // pred_check
      _
    $region7: #{tpu_custom_call.1} parent=1 // pred_check_branch
      %23 = sbr.rel (0) target = $region9
    $region8: #{tpu_custom_call.1} parent=1 // pred_region
      %s25 = ssub.s32 64, 64
      %26 = vsyncadd [#allocation6], %s25
      %s28 = sshll.u32 [#allocation5], 4
      %s29 = int_to_ptr.vmem [resolvable:$true] %s28
      %31 = dma.hbm_to_vmem [thread:$0]  %s1, 64, %s29, [#allocation6]
    $region9: #{tpu_custom_call.1} parent=1 // pred_fallthru
      _
    // Predicated region
    $region10: #{tpu_custom_call.1} parent=1 // pred_check
      _
    $region11: #{tpu_custom_call.1} parent=1 // pred_check_branch
      %33 = sbr.rel (0) target = $region13
    $region12: #{tpu_custom_call.1} parent=1 // pred_region
      %34 = dma.done [#allocation3], 256
    $region13: #{tpu_custom_call.1} parent=1 // pred_fallthru
      _
    // Predicated region
    $region14: #{tpu_custom_call.1} parent=1 // pred_check
      _
    $region15: #{tpu_custom_call.1} parent=1 // pred_check_branch
      %36 = sbr.rel (0) target = $region17
    $region16: #{tpu_custom_call.1} parent=1 // pred_region
      %37 = dma.done [#allocation6], 64
    $region17: #{tpu_custom_call.1} parent=1 // pred_fallthru
      _
    %v38 = vlaneseq
    %v39 = vand.u32 %v38, 127
    %v40 = vadd.s32 %v39, 128
    %vm41 = vcmp.lt.s32.totalorder %v39, 128
    %vm42 = vcmp.lt.s32.totalorder %v40, 128
    %vm43 = vcmp.lt.s32.totalorder %v39, 0
    %v44 = vsub.s32 0, %v39
    %v45 = vsel %vm43, %v44, %v39
    %v46 = vshrl.u32 %v45, 4
    %v47 = vand.u32 %v45, 15
    %v48 = vsub.s32 0, %v47
    %v49 = vsel %vm43, %v48, %v47
    %vm50 = vcmp.lt.s32.totalorder %v40, 0
    %v51 = vsub.s32 0, %v40
    %v52 = vsel %vm50, %v51, %v40
    %v53 = vshrl.u32 %v52, 4
    %v54 = vand.u32 %v52, 15
    %v55 = vsub.s32 0, %v54
    %v56 = vsel %vm50, %v55, %v54
    %vm57 = vcmp.ne.s32.totalorder %v49, 0
    %vm58 = vcmp.ne.s32.totalorder %v56, 0
    %vm59 = vcmp.lt.s32.totalorder %v49, 0
    %vm60 = vcmp.lt.s32.totalorder %v56, 0
    %vm61 = vmand %vm59, %vm57
    %vm62 = vmand %vm60, %vm58
    %v63 = vadd.s32 %v49, 16
    %v64 = vadd.s32 %v56, 16
    %v65 = vsel %vm61, %v63, %v49
    %v66 = vsel %vm62, %v64, %v56
    %vm67 = vcmp.lt.s32.totalorder %v65, 8
    %vm68 = vcmp.lt.s32.totalorder %v66, 8
    %v69 = vld [vmem:[#allocation2] sm:$0xff]
    %vm70 = vcmask 1043456
    %v71 = vsel %vm70, %v69, 0.0
    %72 = vadd.xlane.f32.xlu0 %v71
    %v73 = vpop.xlane.xlu0 %72
    %v75 = vcombine.high %v69, %v69
    %v77 = vsel %vm70, %v75, 0.0
    %78 = vadd.xlane.f32.xlu0 %v77
    %v79 = vpop.xlane.xlu0 %78
    %v80 = vsel %vm67, 1, 0
    %vm81 = vcmp.eq.s32.totalorder %v80, 1
    %v82 = vsel %vm81, %v69, 0.0
    %v83 = vsel %vm70, %v82, 0.0
    %84 = vadd.xlane.f32.xlu0 %v83
    %v85 = vpop.xlane.xlu0 %84
    %v86 = vsel %vm81, %v75, 0.0
    %v87 = vsel %vm70, %v86, 0.0
    %88 = vadd.xlane.f32.xlu0 %v87
    %v89 = vpop.xlane.xlu0 %88
    %v90 = vsub.f32 %v73, %v85
    %v91 = vsub.f32 %v79, %v89
    %v92 = vadd.f32 %v73, %v79
    %v93 = vmul.f32 %v92, 0.00390625
    %vm94 = vcmask 7168
    %v95 = vsel %vm94, %v85, %v90
    %vm96 = vcmask 15360
    %v97 = vsel %vm96, %v95, %v89
    %vm98 = vcmask 23552
    %v99 = vsel %vm98, %v97, %v91
    %v100 = vmul.f32 %v99, 0.015625
    %102 = vrot.lane.b32.xlu0 %v100, 1
    %v103 = vpop.permute.xlu0 %102
    %v105 = vsel %vm94, %v93, %v103
    %s106 = scalar_lea.vmem [#allocation2], 8
    %v107 = vld [vmem:[%s106] sm:$0xff]
    %v108 = vsel %vm70, %v107, 0.0
    %109 = vadd.xlane.f32.xlu0 %v108
    %v110 = vpop.xlane.xlu0 %109
    %v112 = vcombine.high %v107, %v107
    %v114 = vsel %vm70, %v112, 0.0
    %115 = vadd.xlane.f32.xlu0 %v114
    %v116 = vpop.xlane.xlu0 %115
    %v117 = vsel %vm81, %v107, 0.0
    %v118 = vsel %vm70, %v117, 0.0
    %119 = vadd.xlane.f32.xlu0 %v118
    %v120 = vpop.xlane.xlu0 %119
    %v121 = vsel %vm81, %v112, 0.0
    %v122 = vsel %vm70, %v121, 0.0
    %123 = vadd.xlane.f32.xlu0 %v122
    %v124 = vpop.xlane.xlu0 %123
    %v125 = vsub.f32 %v110, %v120
    %v126 = vsub.f32 %v116, %v124
    %v127 = vadd.f32 %v110, %v116
    %v128 = vmul.f32 %v127, 0.00390625
    %v129 = vsel %vm94, %v120, %v125
    %v130 = vsel %vm96, %v129, %v124
    %v131 = vsel %vm98, %v130, %v126
    %v132 = vmul.f32 %v131, 0.015625
    %134 = vrot.lane.b32.xlu0 %v132, 1
    %v135 = vpop.permute.xlu0 %134
    %v137 = vsel %vm94, %v128, %v135
    %139 = vrot.lane.b32.xlu0 %v137, 5
    %v140 = vpop.permute.xlu0 %139
    %vm142 = vcmask 39936
    %v143 = vsel %vm142, %v105, %v140
    %v144 = vld [vmem:[#allocation5] sm:$0xf]
    %vm145 = vcmask 31744
    %v147 = vsel %vm145, %v144, 0
    %v150 = vsel %vm70, %v143, 0
    %152 = vmatprep.subr.mxu0 0.0
    %153 = vmatpush1.msra.mxu0 %v150
    %154 = vmatprep.subr.mxu0 0.0
    %155 = vmatpush1.msra.mxu0 0.0
    %156 = vmatprep.subr.mxu0 0.0
    %157 = vmatpush1.msra.mxu0 0.0
    %158 = vmatprep.subr.mxu0 0.0
    %159 = vmatpush1.msra.mxu0 0.0
    %160 = vmatprep.subr.mxu0 0.0
    %161 = vmatpush1.msra.mxu0 0.0
    %162 = vmatprep.subr.mxu0 0.0
    %163 = vmatpush1.msra.mxu0 0.0
    %164 = vmatprep.subr.mxu0 0.0
    %165 = vmatpush1.msra.mxu0 0.0
    %166 = vmatprep.subr.mxu0 0.0
    %167 = vmatpush1.msra.mxu0 0.0
    %168 = vmatprep.subr.mxu0 0.0
    %169 = vmatpush1.msra.mxu0 0.0
    %170 = vmatprep.subr.mxu0 0.0
    %171 = vmatpush1.msra.mxu0 0.0
    %172 = vmatprep.subr.mxu0 0.0
    %173 = vmatpush1.msra.mxu0 0.0
    %174 = vmatprep.subr.mxu0 0.0
    %175 = vmatpush1.msra.mxu0 0.0
    %176 = vmatprep.subr.mxu0 0.0
    %177 = vmatpush1.msra.mxu0 0.0
    %178 = vmatprep.subr.mxu0 0.0
    %179 = vmatpush1.msra.mxu0 0.0
    %180 = vmatprep.subr.mxu0 0.0
    %181 = vmatpush1.msra.mxu0 0.0
    %182 = vmatprep.subr.mxu0 0.0
    %183 = vmatpush1.msra.mxu0 0.0
    %184 = vmatprep.subr.mxu0 0.0
    %185 = vmatpush1.msra.mxu0 0.0
    %186 = vmatprep.subr.mxu0 0.0
    %187 = vmatpush1.msra.mxu0 0.0
    %188 = vmatprep.subr.mxu0 0.0
    %189 = vmatpush1.msra.mxu0 0.0
    %190 = vmatprep.subr.mxu0 0.0
    %191 = vmatpush1.msra.mxu0 0.0
    %192 = vmatprep.subr.mxu0 0.0
    %193 = vmatpush1.msra.mxu0 0.0
    %194 = vmatprep.subr.mxu0 0.0
    %195 = vmatpush1.msra.mxu0 0.0
    %196 = vmatprep.subr.mxu0 0.0
    %197 = vmatpush1.msra.mxu0 0.0
    %198 = vmatprep.subr.mxu0 0.0
    %199 = vmatpush1.msra.mxu0 0.0
    %200 = vmatprep.subr.mxu0 0.0
    %201 = vmatpush1.msra.mxu0 0.0
    %202 = vmatprep.subr.mxu0 0.0
    %203 = vmatpush1.msra.mxu0 0.0
    %204 = vmatprep.subr.mxu0 0.0
    %205 = vmatpush1.msra.mxu0 0.0
    %206 = vmatprep.subr.mxu0 0.0
    %207 = vmatpush1.msra.mxu0 0.0
    %208 = vmatprep.subr.mxu0 0.0
    %209 = vmatpush1.msra.mxu0 0.0
    %210 = vmatprep.subr.mxu0 0.0
    %211 = vmatpush1.msra.mxu0 0.0
    %212 = vmatprep.subr.mxu0 0.0
    %213 = vmatpush1.msra.mxu0 0.0
    %214 = vmatprep.subr.mxu0 0.0
    %215 = vmatpush1.msra.mxu0 0.0
    %216 = vmatprep.mubr.f32.mxu0 0.0
    %217 = vmatmul.mubr.f32.gmra.mrb[0].mxu0 %v147
    %v218 = vpop.f32.mrb[0].mxu0
    %v219 = vadd.f32 0.0, %v218
    %v220 = vpop.f32.mrb[0].mxu0
    %221 = vdwg.mxu0
    %v222 = vmax.f32 %v219, 0.0
    %223 = vst [vmem:[#allocation7] sm:$0xf] %v69
    %224 = vst [vmem:[#allocation7 + $0x8] sm:$0xf] %v75
    %226 = vset.pattern.permute.xlu0 0
    %227 = vperm.xlu0 %226, %v222
    %v228 = vpop.permute.xlu0 %227
    %v229 = vrot.slane %v228, 4
    %231 = vst [vmem:[#allocation7] sm:$0x30] %v229
    %232 = vst [vmem:[#allocation7 + $0x8] sm:$0x30] %v229
    %v233 = vsel %vm68, 1, 0
    %vm234 = vcmp.eq.s32.totalorder %v233, 1
    %235 = vset.pattern.permute.xlu0 1
    %236 = vperm.xlu0 %235, %v222
    %v237 = vpop.permute.xlu0 %236
    %239 = vset.pattern.permute.xlu0 2
    %240 = vperm.xlu0 %239, %v222
    %v241 = vpop.permute.xlu0 %240
    %v243 = vsel %vm81, %v237, %v241
    %v244 = vsel %vm234, %v237, %v241
    %245 = vset.pattern.permute.xlu0 3
    %246 = vperm.xlu0 %245, %v222
    %v247 = vpop.permute.xlu0 %246
    %249 = vset.pattern.permute.xlu0 4
    %250 = vperm.xlu0 %249, %v222
    %v251 = vpop.permute.xlu0 %250
    %v253 = vsel %vm81, %v247, %v251
    %v254 = vsel %vm234, %v247, %v251
    %v255 = vsel %vm41, 1, 0
    %v256 = vsel %vm42, 1, 0
    %vm257 = vcmp.eq.s32.totalorder %v255, 1
    %vm258 = vcmp.eq.s32.totalorder %v256, 1
    %v259 = vsel %vm257, %v243, %v253
    %v260 = vsel %vm258, %v244, %v254
    %v263 = vrot.slane %v259, 4
    %v264 = vrot.slane %v260, 4
    %267 = vst [vmem:[#allocation7] sm:$0xc0] %v263
    %268 = vst [vmem:[#allocation7 + $0x8] sm:$0xc0] %v264
    %v269 = vld [vmem:[%s106] sm:$0xff]
    %v271 = vcombine.high %v269, %v269
    %s273 = scalar_lea.vmem [#allocation7], 16
    %274 = vst [vmem:[%s273] sm:$0xf] %v269
    %275 = vst [vmem:[%s273 + $0x8] sm:$0xf] %v271
    %276 = vset.pattern.permute.xlu0 5
    %277 = vperm.xlu0 %276, %v222
    %v278 = vpop.permute.xlu0 %277
    %v279 = vrot.slane %v278, 4
    %281 = vst [vmem:[%s273] sm:$0x30] %v279
    %282 = vst [vmem:[%s273 + $0x8] sm:$0x30] %v279
    %283 = vset.pattern.permute.xlu0 6
    %284 = vperm.xlu0 %283, %v222
    %v285 = vpop.permute.xlu0 %284
    %287 = vset.pattern.permute.xlu0 7
    %288 = vperm.xlu0 %287, %v222
    %v289 = vpop.permute.xlu0 %288
    %v291 = vsel %vm81, %v285, %v289
    %v292 = vsel %vm234, %v285, %v289
    %293 = vset.pattern.permute.xlu0 8
    %294 = vperm.xlu0 %293, %v222
    %v295 = vpop.permute.xlu0 %294
    %297 = vset.pattern.permute.xlu0 9
    %298 = vperm.xlu0 %297, %v222
    %v299 = vpop.permute.xlu0 %298
    %v301 = vsel %vm81, %v295, %v299
    %v302 = vsel %vm234, %v295, %v299
    %v303 = vsel %vm257, %v291, %v301
    %v304 = vsel %vm258, %v292, %v302
    %v307 = vrot.slane %v303, 4
    %v308 = vrot.slane %v304, 4
    %311 = vst [vmem:[%s273] sm:$0xc0] %v307
    %312 = vst [vmem:[%s273 + $0x8] sm:$0xc0] %v308
    // Predicated region
    $region18: #{tpu_custom_call.1} parent=1 // pred_check
      _
    $region19: #{tpu_custom_call.1} parent=1 // pred_check_branch
      %314 = sbr.rel (0) target = $region21
    $region20: #{tpu_custom_call.1} parent=1 // pred_region
      %s316 = ssub.s32 512, 512
      %317 = vsyncadd [#allocation4], %s316
      %s318 = sshll.u32 [#allocation7], 4
      %s319 = int_to_ptr.vmem [resolvable:$true] %s318
      %324 = dma.vmem_to_hbm [thread:$0]  %s319, 512, %s2, [#allocation4], 256, 256, 16
    $region21: #{tpu_custom_call.1} parent=1 // pred_fallthru
      _
    // Predicated region
    $region22: #{tpu_custom_call.1} parent=1 // pred_check
      _
    $region23: #{tpu_custom_call.1} parent=1 // pred_check_branch
      %326 = sbr.rel (0) target = $region25
    $region24: #{tpu_custom_call.1} parent=1 // pred_region
      %327 = dma.done [#allocation4], 512
    $region25: #{tpu_custom_call.1} parent=1 // pred_fallthru
      _
    %328 = vsyncpa [#allocation3], 1
    %329 = vsyncpa [#allocation6], 1
    %330 = vsyncpa [#allocation4], 1

</llo_original>
